<compile_context>
chip_gen: v7x
topology: tpu7x:2x2x1
jax: 0.10.0
libtpu: 0.0.40
codegen_flags: <defaults>
</compile_context>

<pallas_src>
import jax
import jax.numpy as jnp
from jax.experimental import pallas as pl
from jax.experimental.pallas import tpu as pltpu


def _round_up(x, m):
    return ((x + m - 1) // m) * m


# ---------------------------------------------------------------------------
# Kernel: one batch tile of the whole MLP (2 hidden ReLU layers + linear head)
# ---------------------------------------------------------------------------
def critic_mlp_kernel(s_ref, a_ref, w1s_ref, w1a_ref, b1_ref,
                      w2_ref, b2_ref, w3r_ref, b3_ref, o_ref):
    # Layer 1: (fused concat) s@W1_s + a@W1_a + b1, ReLU.  bf16 operands, f32 acc.
    h1 = jnp.dot(s_ref[...], w1s_ref[...], preferred_element_type=jnp.float32)
    h1 = h1 + jnp.dot(a_ref[...], w1a_ref[...], preferred_element_type=jnp.float32)
    h1 = jnp.maximum(h1 + b1_ref[...], 0.0)

    # Layer 2: Linear + ReLU (bf16 operands, f32 accumulation).
    h2 = jnp.dot(h1.astype(jnp.bfloat16), w2_ref[...],
                 preferred_element_type=jnp.float32)
    h2 = jnp.maximum(h2 + b2_ref[...], 0.0)

    # Output layer: (TB, H) x (H, 1) done as VPU multiply + lane reduction
    # (keeps the MXU free; only 1 output column is valid anyway). f32 throughout.
    q = jnp.sum(h2 * w3r_ref[...], axis=-1, keepdims=True) + b3_ref[...]
    o_ref[...] = q.astype(o_ref.dtype)


# ---------------------------------------------------------------------------
# Parameter prep: split w1 (removes concat), pad hidden dims to 128 lanes,
# cast matmul operands to bf16.  Done once, outside the hot path.
# ---------------------------------------------------------------------------
def pack_params(params, state_dim):
    w1, b1, w2, b2, w3, b3 = params
    in_dim, h1 = w1.shape
    h2 = w2.shape[1]
    assert in_dim > state_dim, "input_size must be state_dim + action_dim"
    h1p = max(128, _round_up(h1, 128))
    h2p = max(128, _round_up(h2, 128))

    w1p = jnp.pad(w1, ((0, 0), (0, h1p - h1)))
    b1p = jnp.pad(b1, ((0, 0), (0, h1p - h1)))
    w2p = jnp.pad(w2, ((0, h1p - h1), (0, h2p - h2)))
    b2p = jnp.pad(b2, ((0, 0), (0, h2p - h2)))
    w3p = jnp.pad(w3, ((0, h2p - h2), (0, 0)))  # (h2p, 1)

    return (
        w1p[:state_dim].astype(jnp.bfloat16),   # w1_s : (state_dim, h1p)
        w1p[state_dim:].astype(jnp.bfloat16),   # w1_a : (action_dim, h1p)
        b1p,                                    # b1   : (1, h1p) f32
        w2p.astype(jnp.bfloat16),               # w2   : (h1p, h2p)
        b2p,                                    # b2   : (1, h2p) f32
        jnp.transpose(w3p),                     # w3_r : (1, h2p) f32
        b3,                                     # b3   : (1, 1) f32
    )


# ---------------------------------------------------------------------------
# Wrapper: batch grid, tail padding, bf16 cast of activations.
# ---------------------------------------------------------------------------
def critic_forward(s, a, packed, *, tb=1024):
    """s: (B, state_dim), a: (B, action_dim) -> q: (B, 1) float32."""
    w1_s, w1_a, b1, w2, b2, w3_row, b3 = packed
    B, state_dim = s.shape
    action_dim = a.shape[1]
    h1p = w1_s.shape[1]
    h2p = w2.shape[1]

    # Batch tile: whole batch if it is small, otherwise tb with tail padding.
    if B <= tb:
        TB, Bp = B, B
    else:
        TB = tb
        Bp = _round_up(B, TB)
    if Bp != B:
        pad = Bp - B
        s = jnp.pad(s, ((0, pad), (0, 0)))
        a = jnp.pad(a, ((0, pad), (0, 0)))

    s_b = s.astype(jnp.bfloat16)
    a_b = a.astype(jnp.bfloat16)

    rep = lambda shape: pl.BlockSpec(shape, lambda i: (0, 0))  # replicated params

    q = pl.pallas_call(
        critic_mlp_kernel,
        out_shape=jax.ShapeDtypeStruct((Bp, 1), jnp.float32),
        grid=(Bp // TB,),
        in_specs=[
            pl.BlockSpec((TB, state_dim), lambda i: (i, 0)),   # s tile
            pl.BlockSpec((TB, action_dim), lambda i: (i, 0)),  # a tile
            rep((state_dim, h1p)),                             # w1_s
            rep((action_dim, h1p)),                            # w1_a
            rep((1, h1p)),                                     # b1
            rep((h1p, h2p)),                                   # w2
            rep((1, h2p)),                                     # b2
            rep((1, h2p)),                                     # w3 row
            rep((1, 1)),                                       # b3
        ],
        out_specs=pl.BlockSpec((TB, 1), lambda i: (i, 0)),
        compiler_params=pltpu.CompilerParams(
            dimension_semantics=("parallel",)),                # v7x: both TCs
    )(s_b, a_b, w1_s, w1_a, b1, w2, b2, w3_row, b3)

    return q[:B]


# ---------------------------------------------------------------------------
# Init + pure-JAX reference (mirrors the kernel's bf16 operand / f32 acc math)
# ---------------------------------------------------------------------------
def init_params(key, input_size, hidden_sizes):
    """Deterministic Linear-like init (uniform in +/- 1/sqrt(fan_in))."""
    sizes = [input_size] + list(hidden_sizes) + [1]
    params = []
    for fan_in, fan_out in zip(sizes[:-1], sizes[1:]):
        key, kw, kb = jax.random.split(key, 3)
        bound = 1.0 / jnp.sqrt(jnp.float32(fan_in))
        w = jax.random.uniform(kw, (fan_in, fan_out), jnp.float32, -bound, bound)
        b = jax.random.uniform(kb, (1, fan_out), jnp.float32, -bound, bound)
        params += [w, b]
    return tuple(params)


def critic_ref(s, a, params):
    x = jnp.concatenate([s, a], axis=1)
    w1, b1, w2, b2, w3, b3 = params
    h1 = jnp.maximum(
        jnp.dot(x.astype(jnp.bfloat16), w1.astype(jnp.bfloat16),
                preferred_element_type=jnp.float32) + b1, 0.0)
    h2 = jnp.maximum(
        jnp.dot(h1.astype(jnp.bfloat16), w2.astype(jnp.bfloat16),
                preferred_element_type=jnp.float32) + b2, 0.0)
    return jnp.dot(h2, w3) + b3


if __name__ == "__main__":
    # Small TD3-style shapes: state_dim=12, action_dim=4 -> input_size=16
    batch, state_dim, action_dim = 2, 12, 4
    hidden_sizes = (32, 32)
    input_size = state_dim + action_dim

    key = jax.random.PRNGKey(0)
    ks, ka, kp = jax.random.split(key, 3)
    s = jax.random.normal(ks, (batch, state_dim), jnp.float32)
    a = jax.random.normal(ka, (batch, action_dim), jnp.float32)
    params = init_params(kp, input_size, hidden_sizes)
    packed = pack_params(params, state_dim)

    # Small-batch path (single tile).
    q = jax.block_until_ready(critic_forward(s, a, packed))
    q_ref = critic_ref(s, a, params)
    assert q.shape == (batch, 1), q.shape
    assert jnp.allclose(q, q_ref, atol=5e-3, rtol=5e-3), (q, q_ref)

    # Larger-batch path: exercises the batch grid, tail padding, parallel axis.
    B2 = 1100
    ks2, ka2 = jax.random.split(jax.random.PRNGKey(1))
    s2 = jax.random.normal(ks2, (B2, state_dim), jnp.float32)
    a2 = jax.random.normal(ka2, (B2, action_dim), jnp.float32)
    q2 = jax.block_until_ready(critic_forward(s2, a2, packed, tb=512))
    q2_ref = critic_ref(s2, a2, params)
    assert q2.shape == (B2, 1), q2.shape
    assert jnp.allclose(q2, q2_ref, atol=5e-3, rtol=5e-3)

    print("KERNEL_OK")
</pallas_src>

<mosaic_0001>
module attributes {stable_mosaic.version = 11 : i64} {
  func.func @critic_mlp_kernel(%arg0: i32, %arg1: memref<2x12xbf16, #tpu.memory_space<vmem>>, %arg2: memref<2x4xbf16, #tpu.memory_space<vmem>>, %arg3: memref<12x128xbf16, #tpu.memory_space<vmem>>, %arg4: memref<4x128xbf16, #tpu.memory_space<vmem>>, %arg5: memref<1x128xf32, #tpu.memory_space<vmem>>, %arg6: memref<128x128xbf16, #tpu.memory_space<vmem>>, %arg7: memref<1x128xf32, #tpu.memory_space<vmem>>, %arg8: memref<1x128xf32, #tpu.memory_space<vmem>>, %arg9: memref<1x1xf32, #tpu.memory_space<vmem>>, %arg10: memref<2x1xf32, #tpu.memory_space<vmem>>) attributes {dimension_semantics = [#tpu.dimension_semantics<parallel>], iteration_bounds = array<i64: 1>, scalar_prefetch = 0 : i64, scratch_operands = 0 : i64, tpu.core_type = #tpu.core_type<tc>, window_params = [{transform_indices = @transform_0, window_bounds = array<i64: 2, 12>}, {transform_indices = @transform_1, window_bounds = array<i64: 2, 4>}, {pipeline_mode = #tpu.pipeline_mode<synchronous>, transform_indices = @transform_2, window_bounds = array<i64: 12, 128>}, {pipeline_mode = #tpu.pipeline_mode<synchronous>, transform_indices = @transform_3, window_bounds = array<i64: 4, 128>}, {pipeline_mode = #tpu.pipeline_mode<synchronous>, transform_indices = @transform_4, window_bounds = array<i64: 1, 128>}, {pipeline_mode = #tpu.pipeline_mode<synchronous>, transform_indices = @transform_5, window_bounds = array<i64: 128, 128>}, {pipeline_mode = #tpu.pipeline_mode<synchronous>, transform_indices = @transform_6, window_bounds = array<i64: 1, 128>}, {pipeline_mode = #tpu.pipeline_mode<synchronous>, transform_indices = @transform_7, window_bounds = array<i64: 1, 128>}, {pipeline_mode = #tpu.pipeline_mode<synchronous>, transform_indices = @transform_8, window_bounds = array<i64: 1, 1>}, {transform_indices = @transform_9, window_bounds = array<i64: 2, 1>}]} {
    %c0 = arith.constant 0 : index
    %c0_0 = arith.constant 0 : index
    %0 = vector.load %arg1[%c0, %c0_0] : memref<2x12xbf16, #tpu.memory_space<vmem>>, vector<2x12xbf16>
    %c0_1 = arith.constant 0 : index
    %c0_2 = arith.constant 0 : index
    %1 = vector.load %arg3[%c0_1, %c0_2] : memref<12x128xbf16, #tpu.memory_space<vmem>>, vector<12x128xbf16>
    %cst = arith.constant dense<0.000000e+00> : vector<2x128xf32>
    %2 = tpu.matmul %0, %1, %cst {dimension_numbers = #tpu.dot_dimension_numbers<[1], [0], [0], [1], [0, 0, 1, 1], [], []>} : vector<2x12xbf16>, vector<12x128xbf16>, vector<2x128xf32> -> vector<2x128xf32>
    %c0_3 = arith.constant 0 : index
    %c0_4 = arith.constant 0 : index
    %3 = vector.load %arg2[%c0_3, %c0_4] : memref<2x4xbf16, #tpu.memory_space<vmem>>, vector<2x4xbf16>
    %c0_5 = arith.constant 0 : index
    %c0_6 = arith.constant 0 : index
    %4 = vector.load %arg4[%c0_5, %c0_6] : memref<4x128xbf16, #tpu.memory_space<vmem>>, vector<4x128xbf16>
    %cst_7 = arith.constant dense<0.000000e+00> : vector<2x128xf32>
    %5 = tpu.matmul %3, %4, %cst_7 {dimension_numbers = #tpu.dot_dimension_numbers<[1], [0], [0], [1], [0, 0, 1, 1], [], []>} : vector<2x4xbf16>, vector<4x128xbf16>, vector<2x128xf32> -> vector<2x128xf32>
    %6 = arith.addf %2, %5 : vector<2x128xf32>
    %c0_8 = arith.constant 0 : index
    %c0_9 = arith.constant 0 : index
    %7 = vector.load %arg5[%c0_8, %c0_9] : memref<1x128xf32, #tpu.memory_space<vmem>>, vector<1x128xf32>
    %8 = vector.broadcast %7 : vector<1x128xf32> to vector<2x128xf32>
    %9 = arith.addf %6, %8 : vector<2x128xf32>
    %cst_10 = arith.constant 0.000000e+00 : f32
    %10 = vector.broadcast %cst_10 : f32 to vector<2x128xf32>
    %11 = arith.maximumf %9, %10 : vector<2x128xf32>
    %12 = arith.truncf %11 : vector<2x128xf32> to vector<2x128xbf16>
    %c0_11 = arith.constant 0 : index
    %c0_12 = arith.constant 0 : index
    %13 = vector.load %arg6[%c0_11, %c0_12] : memref<128x128xbf16, #tpu.memory_space<vmem>>, vector<128x128xbf16>
    %cst_13 = arith.constant dense<0.000000e+00> : vector<2x128xf32>
    %14 = tpu.matmul %12, %13, %cst_13 {dimension_numbers = #tpu.dot_dimension_numbers<[1], [0], [0], [1], [0, 0, 1, 1], [], []>} : vector<2x128xbf16>, vector<128x128xbf16>, vector<2x128xf32> -> vector<2x128xf32>
    %c0_14 = arith.constant 0 : index
    %c0_15 = arith.constant 0 : index
    %15 = vector.load %arg7[%c0_14, %c0_15] : memref<1x128xf32, #tpu.memory_space<vmem>>, vector<1x128xf32>
    %16 = vector.broadcast %15 : vector<1x128xf32> to vector<2x128xf32>
    %17 = arith.addf %14, %16 : vector<2x128xf32>
    %cst_16 = arith.constant 0.000000e+00 : f32
    %18 = vector.broadcast %cst_16 : f32 to vector<2x128xf32>
    %19 = arith.maximumf %17, %18 : vector<2x128xf32>
    %c0_17 = arith.constant 0 : index
    %c0_18 = arith.constant 0 : index
    %20 = vector.load %arg8[%c0_17, %c0_18] : memref<1x128xf32, #tpu.memory_space<vmem>>, vector<1x128xf32>
    %21 = vector.broadcast %20 : vector<1x128xf32> to vector<2x128xf32>
    %22 = arith.mulf %19, %21 : vector<2x128xf32>
    %cst_19 = arith.constant dense<0.000000e+00> : vector<2xf32>
    %23 = vector.multi_reduction <add>, %22, %cst_19 [1] : vector<2x128xf32> to vector<2xf32>
    %24 = vector.shape_cast %23 : vector<2xf32> to vector<2x1xf32>
    %c0_20 = arith.constant 0 : index
    %c0_21 = arith.constant 0 : index
    %25 = vector.load %arg9[%c0_20, %c0_21] : memref<1x1xf32, #tpu.memory_space<vmem>>, vector<1x1xf32>
    %26 = vector.broadcast %25 : vector<1x1xf32> to vector<2x1xf32>
    %27 = arith.addf %24, %26 : vector<2x1xf32>
    %c0_22 = arith.constant 0 : index
    %c0_23 = arith.constant 0 : index
    %28 = vector.load %arg10[%c0_22, %c0_23] : memref<2x1xf32, #tpu.memory_space<vmem>>, vector<2x1xf32>
    tpu.vector_store %arg10[%c0_22, %c0_23], %27 {strides = array<i32>} : memref<2x1xf32, #tpu.memory_space<vmem>>, vector<2x1xf32>,
    return
  }
  func.func @transform_0(%arg0: i32) -> (i32, i32) {
    %c0_i32 = arith.constant 0 : i32
    %c0_i32_0 = arith.constant 0 : i32
    return %arg0, %c0_i32 : i32, i32
  }
  func.func @transform_1(%arg0: i32) -> (i32, i32) {
    %c0_i32 = arith.constant 0 : i32
    %c0_i32_0 = arith.constant 0 : i32
    return %arg0, %c0_i32 : i32, i32
  }
  func.func @transform_2(%arg0: i32) -> (i32, i32) {
    %c0_i32 = arith.constant 0 : i32
    %c0_i32_0 = arith.constant 0 : i32
    %c0_i32_1 = arith.constant 0 : i32
    return %c0_i32, %c0_i32_0 : i32, i32
  }
  func.func @transform_3(%arg0: i32) -> (i32, i32) {
    %c0_i32 = arith.constant 0 : i32
    %c0_i32_0 = arith.constant 0 : i32
    %c0_i32_1 = arith.constant 0 : i32
    return %c0_i32, %c0_i32_0 : i32, i32
  }
  func.func @transform_4(%arg0: i32) -> (i32, i32) {
    %c0_i32 = arith.constant 0 : i32
    %c0_i32_0 = arith.constant 0 : i32
    %c0_i32_1 = arith.constant 0 : i32
    return %c0_i32, %c0_i32_0 : i32, i32
  }
  func.func @transform_5(%arg0: i32) -> (i32, i32) {
    %c0_i32 = arith.constant 0 : i32
    %c0_i32_0 = arith.constant 0 : i32
    %c0_i32_1 = arith.constant 0 : i32
    return %c0_i32, %c0_i32_0 : i32, i32
  }
  func.func @transform_6(%arg0: i32) -> (i32, i32) {
    %c0_i32 = arith.constant 0 : i32
    %c0_i32_0 = arith.constant 0 : i32
    %c0_i32_1 = arith.constant 0 : i32
    return %c0_i32, %c0_i32_0 : i32, i32
  }
  func.func @transform_7(%arg0: i32) -> (i32, i32) {
    %c0_i32 = arith.constant 0 : i32
    %c0_i32_0 = arith.constant 0 : i32
    %c0_i32_1 = arith.constant 0 : i32
    return %c0_i32, %c0_i32_0 : i32, i32
  }
  func.func @transform_8(%arg0: i32) -> (i32, i32) {
    %c0_i32 = arith.constant 0 : i32
    %c0_i32_0 = arith.constant 0 : i32
    %c0_i32_1 = arith.constant 0 : i32
    return %c0_i32, %c0_i32_0 : i32, i32
  }
  func.func @transform_9(%arg0: i32) -> (i32, i32) {
    %c0_i32 = arith.constant 0 : i32
    %c0_i32_0 = arith.constant 0 : i32
    return %arg0, %c0_i32 : i32, i32
  }
}

</mosaic_0001>

<llo_original>
// kernel: tpu_custom_call.1
$region0: #{tpu_custom_call.1}
  #allocation0 [shape = 'u32[]', space=smem, size = 0x4, offset = 0x4, fixed_abs, tag = 'smem constant byte address 0x4 - core index']
  #allocation1 [shape = 'u32[144,128]{1,0:T(1,128)}', space=vmem, size = 0x12000, scoped, tag = 'internal scratch']
  #allocation2 [shape = 'f32[1,1]{1,0:T(1,128)S(1)}', space=vmem, size = 0x200, scoped, tag = 'scoped memory for tpu_custom_call.1']
  %s0 = inlined_call_operand.vmem [shape: bf16[2,12], index: 0, kind: input, shape index: {}]
  %s1 = inlined_call_operand.hbm [shape: bf16[2,4], index: 1, kind: input, shape index: {}]
  %s2 = inlined_call_operand.vmem [shape: bf16[12,128], index: 2, kind: input, shape index: {}]
  %s3 = inlined_call_operand.vmem [shape: bf16[4,128], index: 3, kind: input, shape index: {}]
  %s4 = inlined_call_operand.vmem [shape: f32[1,128], index: 4, kind: input, shape index: {}]
  %s5 = inlined_call_operand.hbm [shape: bf16[128,128], index: 5, kind: input, shape index: {}]
  %s6 = inlined_call_operand.vmem [shape: f32[1,128], index: 6, kind: input, shape index: {}]
  %s7 = inlined_call_operand.vmem [shape: f32[1,128], index: 7, kind: input, shape index: {}]
  %s8 = inlined_call_operand.<no memory space> [shape: f32[1,1], index: 8, kind: input, shape index: {}]
  %s9 = inlined_call_operand.vmem [shape: f32[2,1], index: 9, kind: output, shape index: {}]
  %s10 = sld [smem:[#allocation0]]
  $region54: #{tpu_custom_call.1} parent=0
    _
  %s12 = ssub.s32 1, %s10
  %s13 = scalar_select 0, %s12, %s10
  %v14 = vstv %s8
  %15 = vst [vmem:[#allocation2] sm:$0x1] %v14
  $region1: #{tpu_custom_call.1} parent=0
    #allocation3 [shape = 'u8[512]{0}', space=vmem, size = 0x400, scoped, tag = 'input window, operand 1, single buffered']
    #allocation4 [shape = 's32[1]{0}', space=sflag, size = 0x4, scoped, tag = 'scoped memory for tpu_custom_call.1']
    #allocation5 [shape = 'u8[32768]{0}', space=vmem, size = 0x8000, scoped, tag = 'input window, operand 5, single buffered']
    #allocation6 [shape = 's32[1]{0}', space=sflag, size = 0x4, scoped, tag = 'scoped memory for tpu_custom_call.1']
    %16 = vsyncpa [#allocation4], 0
    %17 = vsyncpa [#allocation6], 0
    // Predicated region
    $region2: #{tpu_custom_call.1} parent=1 // pred_check
      _
    $region3: #{tpu_custom_call.1} parent=1 // pred_check_branch
      %19 = sbr.rel (0) target = $region5
    $region4: #{tpu_custom_call.1} parent=1 // pred_region
      _
    $region5: #{tpu_custom_call.1} parent=1 // pred_fallthru
      _
    // Predicated region
    $region6: #{tpu_custom_call.1} parent=1 // pred_check
      _
    $region7: #{tpu_custom_call.1} parent=1 // pred_check_branch
      %21 = sbr.rel (0) target = $region9
    $region8: #{tpu_custom_call.1} parent=1 // pred_region
      %s23 = ssub.s32 16, 16
      %24 = vsyncadd [#allocation4], %s23
      %s26 = sshll.u32 [#allocation3], 4
      %s27 = int_to_ptr.vmem [resolvable:$true] %s26
      %29 = dma.hbm_to_vmem [thread:$0]  %s1, 16, %s27, [#allocation4]
    $region9: #{tpu_custom_call.1} parent=1 // pred_fallthru
      _
    // Predicated region
    $region10: #{tpu_custom_call.1} parent=1 // pred_check
      _
    $region11: #{tpu_custom_call.1} parent=1 // pred_check_branch
      %31 = sbr.rel (0) target = $region13
    $region12: #{tpu_custom_call.1} parent=1 // pred_region
      _
    $region13: #{tpu_custom_call.1} parent=1 // pred_fallthru
      _
    // Predicated region
    $region14: #{tpu_custom_call.1} parent=1 // pred_check
      _
    $region15: #{tpu_custom_call.1} parent=1 // pred_check_branch
      %33 = sbr.rel (0) target = $region17
    $region16: #{tpu_custom_call.1} parent=1 // pred_region
      _
    $region17: #{tpu_custom_call.1} parent=1 // pred_fallthru
      _
    // Predicated region
    $region18: #{tpu_custom_call.1} parent=1 // pred_check
      _
    $region19: #{tpu_custom_call.1} parent=1 // pred_check_branch
      %35 = sbr.rel (0) target = $region21
    $region20: #{tpu_custom_call.1} parent=1 // pred_region
      _
    $region21: #{tpu_custom_call.1} parent=1 // pred_fallthru
      _
    // Predicated region
    $region22: #{tpu_custom_call.1} parent=1 // pred_check
      _
    $region23: #{tpu_custom_call.1} parent=1 // pred_check_branch
      %37 = sbr.rel (0) target = $region25
    $region24: #{tpu_custom_call.1} parent=1 // pred_region
      %s39 = ssub.s32 1024, 1024
      %40 = vsyncadd [#allocation6], %s39
      %s41 = sshll.u32 [#allocation5], 4
      %s42 = int_to_ptr.vmem [resolvable:$true] %s41
      %47 = dma.hbm_to_vmem [thread:$0]  %s5, 1024, %s42, [#allocation6], 64, 64, 4
    $region25: #{tpu_custom_call.1} parent=1 // pred_fallthru
      _
    // Predicated region
    $region26: #{tpu_custom_call.1} parent=1 // pred_check
      _
    $region27: #{tpu_custom_call.1} parent=1 // pred_check_branch
      %49 = sbr.rel (0) target = $region29
    $region28: #{tpu_custom_call.1} parent=1 // pred_region
      _
    $region29: #{tpu_custom_call.1} parent=1 // pred_fallthru
      _
    // Predicated region
    $region30: #{tpu_custom_call.1} parent=1 // pred_check
      _
    $region31: #{tpu_custom_call.1} parent=1 // pred_check_branch
      %51 = sbr.rel (0) target = $region33
    $region32: #{tpu_custom_call.1} parent=1 // pred_region
      _
    $region33: #{tpu_custom_call.1} parent=1 // pred_fallthru
      _
    // Predicated region
    $region34: #{tpu_custom_call.1} parent=1 // pred_check
      _
    $region35: #{tpu_custom_call.1} parent=1 // pred_check_branch
      %53 = sbr.rel (0) target = $region37
    $region36: #{tpu_custom_call.1} parent=1 // pred_region
      _
    $region37: #{tpu_custom_call.1} parent=1 // pred_fallthru
      _
    // Predicated region
    $region38: #{tpu_custom_call.1} parent=1 // pred_check
      _
    $region39: #{tpu_custom_call.1} parent=1 // pred_check_branch
      %55 = sbr.rel (0) target = $region41
    $region40: #{tpu_custom_call.1} parent=1 // pred_region
      %56 = dma.done [#allocation4], 16
    $region41: #{tpu_custom_call.1} parent=1 // pred_fallthru
      _
    // Predicated region
    $region42: #{tpu_custom_call.1} parent=1 // pred_check
      _
    $region43: #{tpu_custom_call.1} parent=1 // pred_check_branch
      %58 = sbr.rel (0) target = $region45
    $region44: #{tpu_custom_call.1} parent=1 // pred_region
      %59 = dma.done [#allocation6], 1024
    $region45: #{tpu_custom_call.1} parent=1 // pred_fallthru
      _
    %v61 = vld [vmem:[%s0] sm:$0x1]
    %v62 = vld [vmem:[%s2] sm:$0xf]
    %v63 = vld [vmem:[%s2 + $0x4] sm:$0x3]
    %v64 = vld [vmem:[#allocation3] sm:$0x1]
    %v65 = vld [vmem:[%s3] sm:$0x3]
    %vm66 = vcmask 31744
    %v68 = vsel %vm66, %v64, 0
    %vm70 = vcmask 1041408
    %v72 = vsel %vm70, %v65, 0
    %74 = vmatprep.subr.bf16.mxu0 0
    %75 = vmatpush1.bf16.msra.mxu0 %v72
    %76 = vmatprep.subr.bf16.mxu0 0
    %77 = vmatpush1.bf16.msra.mxu0 0
    %78 = vmatprep.subr.bf16.mxu0 0
    %79 = vmatpush1.bf16.msra.mxu0 0
    %80 = vmatprep.subr.bf16.mxu0 0
    %81 = vmatpush1.bf16.msra.mxu0 0
    %82 = vmatprep.subr.bf16.mxu0 0
    %83 = vmatpush1.bf16.msra.mxu0 0
    %84 = vmatprep.subr.bf16.mxu0 0
    %85 = vmatpush1.bf16.msra.mxu0 0
    %86 = vmatprep.subr.bf16.mxu0 0
    %87 = vmatpush1.bf16.msra.mxu0 0
    %88 = vmatprep.subr.bf16.mxu0 0
    %89 = vmatpush1.bf16.msra.mxu0 0
    %90 = vmatprep.subr.bf16.mxu0 0
    %91 = vmatpush1.bf16.msra.mxu0 0
    %92 = vmatprep.subr.bf16.mxu0 0
    %93 = vmatpush1.bf16.msra.mxu0 0
    %94 = vmatprep.subr.bf16.mxu0 0
    %95 = vmatpush1.bf16.msra.mxu0 0
    %96 = vmatprep.subr.bf16.mxu0 0
    %97 = vmatpush1.bf16.msra.mxu0 0
    %98 = vmatprep.subr.bf16.mxu0 0
    %99 = vmatpush1.bf16.msra.mxu0 0
    %100 = vmatprep.subr.bf16.mxu0 0
    %101 = vmatpush1.bf16.msra.mxu0 0
    %102 = vmatprep.subr.bf16.mxu0 0
    %103 = vmatpush1.bf16.msra.mxu0 0
    %104 = vmatprep.subr.bf16.mxu0 0
    %105 = vmatpush1.bf16.msra.mxu0 0
    %106 = vmatprep.mubr.bf16.mxu0 0
    %107 = vmatmul.mubr.bf16.gmra.mrb[0].mxu0 %v68
    %v108 = vpop.f32.mrb[0].mxu0
    %v109 = vadd.f32 0.0, %v108
    %v110 = vpop.f32.mrb[0].mxu0
    %v111 = vpop.f32.mrb[0].mxu0
    %v112 = vpop.f32.mrb[0].mxu0
    %113 = vdwg.mxu0
    %v116 = vunpack.c.l.b16 %v62
    %v117 = vunpack.c.l.b16 %v63
    %v118 = vpack.c.b16 %v117, %v116
    %vm119 = vcmask 97280
    %v121 = vsel %vm119, %v61, 0
    %vm123 = vcmask 1045504
    %v125 = vsel %vm123, %v118, 0
    %127 = vmatprep.subr.bf16.mxu0 0
    %128 = vmatpush1.bf16.msra.mxu0 %v125
    %129 = vmatprep.subr.bf16.mxu0 0
    %130 = vmatpush1.bf16.msra.mxu0 0
    %131 = vmatprep.subr.bf16.mxu0 0
    %132 = vmatpush1.bf16.msra.mxu0 0
    %133 = vmatprep.subr.bf16.mxu0 0
    %134 = vmatpush1.bf16.msra.mxu0 0
    %135 = vmatprep.subr.bf16.mxu0 0
    %136 = vmatpush1.bf16.msra.mxu0 0
    %137 = vmatprep.subr.bf16.mxu0 0
    %138 = vmatpush1.bf16.msra.mxu0 0
    %139 = vmatprep.subr.bf16.mxu0 0
    %140 = vmatpush1.bf16.msra.mxu0 0
    %141 = vmatprep.subr.bf16.mxu0 0
    %142 = vmatpush1.bf16.msra.mxu0 0
    %143 = vmatprep.subr.bf16.mxu0 0
    %144 = vmatpush1.bf16.msra.mxu0 0
    %145 = vmatprep.subr.bf16.mxu0 0
    %146 = vmatpush1.bf16.msra.mxu0 0
    %147 = vmatprep.subr.bf16.mxu0 0
    %148 = vmatpush1.bf16.msra.mxu0 0
    %149 = vmatprep.subr.bf16.mxu0 0
    %150 = vmatpush1.bf16.msra.mxu0 0
    %151 = vmatprep.subr.bf16.mxu0 0
    %152 = vmatpush1.bf16.msra.mxu0 0
    %153 = vmatprep.subr.bf16.mxu0 0
    %154 = vmatpush1.bf16.msra.mxu0 0
    %155 = vmatprep.subr.bf16.mxu0 0
    %156 = vmatpush1.bf16.msra.mxu0 0
    %157 = vmatprep.subr.bf16.mxu0 0
    %158 = vmatpush1.bf16.msra.mxu0 0
    %159 = vmatprep.mubr.bf16.mxu0 0
    %160 = vmatmul.mubr.bf16.gmra.mrb[0].mxu0 %v121
    %v161 = vpop.f32.mrb[0].mxu0
    %v162 = vadd.f32 %v109, %v161
    %v163 = vpop.f32.mrb[0].mxu0
    %v164 = vpop.f32.mrb[0].mxu0
    %v165 = vpop.f32.mrb[0].mxu0
    %166 = vdwg.mxu0
    %v167 = vld [vmem:[%s4] sm:$0x1]
    %v169 = vlaneseq
    %v170 = vshrl.u32 %v169, 7
    %v171 = vsub.s32 0, %v170
    %v172 = vrot.slane %v167, %v171
    %v174 = vadd.f32 %v162, %v172
    %v175 = vmax.f32 %v174, 0.0
    %v176 = vpack.c.bf16 %v175, %v175
    %v177 = vld [vmem:[#allocation5] sm:$0xf]
    %v178 = vld [vmem:[#allocation5 + $0x4] sm:$0xf]
    %v179 = vld [vmem:[#allocation5 + $0x8] sm:$0xf]
    %v180 = vld [vmem:[#allocation5 + $0xc] sm:$0xf]
    %v181 = vld [vmem:[#allocation5 + $0x10] sm:$0xf]
    %v182 = vld [vmem:[#allocation5 + $0x14] sm:$0xf]
    %v183 = vld [vmem:[#allocation5 + $0x18] sm:$0xf]
    %v184 = vld [vmem:[#allocation5 + $0x1c] sm:$0xf]
    %v185 = vld [vmem:[#allocation5 + $0x20] sm:$0xf]
    %v186 = vld [vmem:[#allocation5 + $0x24] sm:$0xf]
    %v187 = vld [vmem:[#allocation5 + $0x28] sm:$0xf]
    %v188 = vld [vmem:[#allocation5 + $0x2c] sm:$0xf]
    %v189 = vld [vmem:[#allocation5 + $0x30] sm:$0xf]
    %v190 = vld [vmem:[#allocation5 + $0x34] sm:$0xf]
    %v191 = vld [vmem:[#allocation5 + $0x38] sm:$0xf]
    %v192 = vld [vmem:[#allocation5 + $0x3c] sm:$0xf]
    %v193 = vld [vmem:[%s6] sm:$0x1]
    %v195 = vlaneseq
    %v196 = vshrl.u32 %v195, 7
    %v197 = vsub.s32 0, %v196
    %v198 = vrot.slane %v193, %v197
    %v216 = vunpack.c.l.b16 %v177
    %v217 = vunpack.c.l.b16 %v178
    %v218 = vunpack.c.l.b16 %v179
    %v219 = vunpack.c.l.b16 %v180
    %v220 = vunpack.c.l.b16 %v181
    %v221 = vunpack.c.l.b16 %v182
    %v222 = vunpack.c.l.b16 %v183
    %v223 = vunpack.c.l.b16 %v184
    %v224 = vunpack.c.l.b16 %v185
    %v225 = vunpack.c.l.b16 %v186
    %v226 = vunpack.c.l.b16 %v187
    %v227 = vunpack.c.l.b16 %v188
    %v228 = vunpack.c.l.b16 %v189
    %v229 = vunpack.c.l.b16 %v190
    %v230 = vunpack.c.l.b16 %v191
    %v231 = vunpack.c.l.b16 %v192
    %v232 = vpack.c.b16 %v217, %v216
    %v233 = vpack.c.b16 %v219, %v218
    %v234 = vpack.c.b16 %v221, %v220
    %v235 = vpack.c.b16 %v223, %v222
    %v236 = vpack.c.b16 %v225, %v224
    %v237 = vpack.c.b16 %v227, %v226
    %v238 = vpack.c.b16 %v229, %v228
    %v239 = vpack.c.b16 %v231, %v230
    %248 = vmatprep.subr.bf16.mxu0 0
    %249 = vmatpush1.bf16.msra.mxu0 %v232
    %250 = vmatprep.subr.bf16.mxu0 0
    %251 = vmatpush1.bf16.msra.mxu0 %v233
    %252 = vmatprep.subr.bf16.mxu0 0
    %253 = vmatpush1.bf16.msra.mxu0 %v234
    %254 = vmatprep.subr.bf16.mxu0 0
    %255 = vmatpush1.bf16.msra.mxu0 %v235
    %256 = vmatprep.subr.bf16.mxu0 0
    %257 = vmatpush1.bf16.msra.mxu0 %v236
    %258 = vmatprep.subr.bf16.mxu0 0
    %259 = vmatpush1.bf16.msra.mxu0 %v237
    %260 = vmatprep.subr.bf16.mxu0 0
    %261 = vmatpush1.bf16.msra.mxu0 %v238
    %262 = vmatprep.subr.bf16.mxu0 0
    %263 = vmatpush1.bf16.msra.mxu0 %v239
    %264 = vmatprep.subr.bf16.mxu0 0
    %265 = vmatpush1.bf16.msra.mxu0 0
    %266 = vmatprep.subr.bf16.mxu0 0
    %267 = vmatpush1.bf16.msra.mxu0 0
    %268 = vmatprep.subr.bf16.mxu0 0
    %269 = vmatpush1.bf16.msra.mxu0 0
    %270 = vmatprep.subr.bf16.mxu0 0
    %271 = vmatpush1.bf16.msra.mxu0 0
    %272 = vmatprep.subr.bf16.mxu0 0
    %273 = vmatpush1.bf16.msra.mxu0 0
    %274 = vmatprep.subr.bf16.mxu0 0
    %275 = vmatpush1.bf16.msra.mxu0 0
    %276 = vmatprep.subr.bf16.mxu0 0
    %277 = vmatpush1.bf16.msra.mxu0 0
    %278 = vmatprep.subr.bf16.mxu0 0
    %279 = vmatpush1.bf16.msra.mxu0 0
    %280 = vmatprep.mubr.bf16.mxu0 0
    %281 = vmatmul.mubr.bf16.gmra.mrb[0].mxu0 %v176
    %v282 = vpop.f32.mrb[0].mxu0
    %v283 = vadd.f32 %v198, %v282
    %v284 = vpop.f32.mrb[0].mxu0
    %v285 = vpop.f32.mrb[0].mxu0
    %v286 = vpop.f32.mrb[0].mxu0
    %287 = vdwg.mxu0
    %v288 = vmax.f32 %v283, 0.0
    %v289 = vld [vmem:[%s7] sm:$0x1]
    %v291 = vlaneseq
    %v292 = vshrl.u32 %v291, 7
    %v293 = vsub.s32 0, %v292
    %v294 = vrot.slane %v289, %v293
    %v296 = vmul.f32 %v288, %v294
    %v297 = vsel %vm70, %v296, 0.0
    %298 = vadd.xlane.f32.xlu0 %v297
    %v299 = vpop.xlane.xlu0 %298
    %v300 = vld [vmem:[#allocation2] sm:$0x1]
    %v302 = vlaneseq
    %v303 = vshrl.u32 %v302, 7
    %v304 = vsub.s32 0, %v303
    %v305 = vrot.slane %v300, %v304
    %v307 = vadd.f32 %v299, %v305
    %vm308 = vcmask 1024
    %309 = vst.msk [vmem:[%s9] sm:$0x3] %vm308, %v307
    // Predicated region
    $region46: #{tpu_custom_call.1} parent=1 // pred_check
      _
    $region47: #{tpu_custom_call.1} parent=1 // pred_check_branch
      %311 = sbr.rel (0) target = $region49
    $region48: #{tpu_custom_call.1} parent=1 // pred_region
      _
    $region49: #{tpu_custom_call.1} parent=1 // pred_fallthru
      _
    // Predicated region
    $region50: #{tpu_custom_call.1} parent=1 // pred_check
      _
    $region51: #{tpu_custom_call.1} parent=1 // pred_check_branch
      %313 = sbr.rel (0) target = $region53
    $region52: #{tpu_custom_call.1} parent=1 // pred_region
      _
    $region53: #{tpu_custom_call.1} parent=1 // pred_fallthru
      _
    %314 = vsyncpa [#allocation4], 1
    %315 = vsyncpa [#allocation6], 1

</llo_original>
